<compile_context>
chip_gen: v5e
topology: v5e:2x2
jax: 0.10.0
libtpu: 0.0.40
codegen_flags: <defaults>
</compile_context>

<pallas_src>
import jax
import jax.numpy as jnp
from jax import lax
from jax.experimental import pallas as pl
from jax.experimental.pallas import tpu as pltpu


def linear_kernel(x_ref, w_ref, b_ref, o_ref):
    # x_ref: (B, K)  w_ref: (N_pad, K) -- native nn.Linear layout
    # b_ref: (1, N_pad)                o_ref: (B, N_pad)
    acc = lax.dot_general(
        x_ref[...],
        w_ref[...],
        dimension_numbers=(((1,), (1,)), ((), ())),   # contract K with K
        preferred_element_type=jnp.float32,
    )
    o_ref[...] = (acc + b_ref[...]).astype(o_ref.dtype)


def neural_net_forward(x, w, b):
    """Equivalent of NeuralNet.forward: x = fc1(x).

    x: (batch, input_size) float32
    w: (num_classes, input_size) float32  (PyTorch nn.Linear weight layout)
    b: (num_classes,) float32
    """
    batch, input_size = x.shape
    num_classes = w.shape[0]

    # Pad the class dim up to a multiple of 128 so the output last dim is
    # lane-dense (unmasked full-vreg stores). Padding rows of W / entries of b
    # are zero, so the extra logits are exactly 0 and are sliced off below.
    n_pad = ((num_classes + 127) // 128) * 128
    w_pad = jnp.pad(w, ((0, n_pad - num_classes), (0, 0)))
    b_pad = jnp.pad(b, (0, n_pad - num_classes)).reshape(1, n_pad)

    itemsize = jnp.dtype(x.dtype).itemsize
    cost = pl.CostEstimate(
        flops=2 * batch * input_size * n_pad,
        transcendentals=0,
        bytes_accessed=(x.size + w_pad.size + b_pad.size + batch * n_pad)
        * itemsize,
    )

    out_pad = pl.pallas_call(
        linear_kernel,
        out_shape=jax.ShapeDtypeStruct((batch, n_pad), x.dtype),
        in_specs=[
            pl.BlockSpec(memory_space=pltpu.MemorySpace.VMEM),
            pl.BlockSpec(memory_space=pltpu.MemorySpace.VMEM),
            pl.BlockSpec(memory_space=pltpu.MemorySpace.VMEM),
        ],
        out_specs=pl.BlockSpec(memory_space=pltpu.MemorySpace.VMEM),
        cost_estimate=cost,
    )(x, w_pad, b_pad)

    # TODO(synk): for much larger batches, grid over the batch dim with a
    # "parallel" axis (v7x: 2 TCs/chip) instead of a single gridless call.
    return out_pad[:, :num_classes]


if __name__ == "__main__":
    key = jax.random.PRNGKey(0)
    kx, kw, kb = jax.random.split(key, 3)

    batch = 128          # 16 f32 sublane tiles; amortizes launch overhead
    input_size = 32      # X_train.shape[1]
    num_classes = 10     # len(np.unique(y_train))

    x = jax.random.normal(kx, (batch, input_size), dtype=jnp.float32)
    # Deterministic "nn.Linear"-style init (uniform in +/- 1/sqrt(fan_in)).
    bound = 1.0 / jnp.sqrt(jnp.float32(input_size))
    w = jax.random.uniform(kw, (num_classes, input_size),
                           minval=-bound, maxval=bound, dtype=jnp.float32)
    b = jax.random.uniform(kb, (num_classes,),
                           minval=-bound, maxval=bound, dtype=jnp.float32)

    out = neural_net_forward(x, w, b)
    out = jax.block_until_ready(out)

    # Reference check against plain JAX.
    ref = x @ w.T + b
    assert out.shape == (batch, num_classes)
    assert jnp.allclose(out, ref, atol=1e-5, rtol=1e-5)

    print("KERNEL_OK")
</pallas_src>

<mosaic_0001>
module attributes {stable_mosaic.version = 11 : i64} {
  func.func @linear_kernel(%arg0: memref<128x32xf32, #tpu.memory_space<vmem>>, %arg1: memref<128x32xf32, #tpu.memory_space<vmem>>, %arg2: memref<1x128xf32, #tpu.memory_space<vmem>>, %arg3: memref<128x128xf32, #tpu.memory_space<vmem>>) attributes {dimension_semantics = [], scalar_prefetch = 0 : i64, scratch_operands = 0 : i64, tpu.core_type = #tpu.core_type<tc>} {
    %c0 = arith.constant 0 : index
    %c0_0 = arith.constant 0 : index
    %0 = vector.load %arg0[%c0, %c0_0] : memref<128x32xf32, #tpu.memory_space<vmem>>, vector<128x32xf32>
    %c0_1 = arith.constant 0 : index
    %c0_2 = arith.constant 0 : index
    %1 = vector.load %arg1[%c0_1, %c0_2] : memref<128x32xf32, #tpu.memory_space<vmem>>, vector<128x32xf32>
    %cst = arith.constant dense<0.000000e+00> : vector<128x128xf32>
    %2 = tpu.matmul %0, %1, %cst {dimension_numbers = #tpu.dot_dimension_numbers<[1], [1], [0], [0], [0, 0, 1, 0], [], []>} : vector<128x32xf32>, vector<128x32xf32>, vector<128x128xf32> -> vector<128x128xf32>
    %c0_3 = arith.constant 0 : index
    %c0_4 = arith.constant 0 : index
    %3 = vector.load %arg2[%c0_3, %c0_4] : memref<1x128xf32, #tpu.memory_space<vmem>>, vector<1x128xf32>
    %4 = vector.broadcast %3 : vector<1x128xf32> to vector<128x128xf32>
    %5 = arith.addf %2, %4 : vector<128x128xf32>
    %c0_5 = arith.constant 0 : index
    %c0_6 = arith.constant 0 : index
    %6 = vector.load %arg3[%c0_5, %c0_6] : memref<128x128xf32, #tpu.memory_space<vmem>>, vector<128x128xf32>
    tpu.vector_store %arg3[%c0_5, %c0_6], %5 {strides = array<i32>} : memref<128x128xf32, #tpu.memory_space<vmem>>, vector<128x128xf32>,
    return
  }
}

</mosaic_0001>

<llo_original>
// kernel: tpu_custom_call.1
$region0: #{tpu_custom_call.1}
  #allocation0 [shape = 'u32[]', space=smem, size = 0x4, offset = 0x4, fixed_abs, tag = 'smem constant byte address 0x4 - core index']
  #allocation1 [shape = 'u32[72,128]{1,0:T(1,128)}', space=vmem, size = 0x9000, scoped, tag = 'internal scratch']
  %s0 = inlined_call_operand.vmem [shape: f32[128,32], index: 0, kind: input, shape index: {}]
  %s1 = inlined_call_operand.vmem [shape: f32[128,32], index: 1, kind: input, shape index: {}]
  %s2 = inlined_call_operand.vmem [shape: f32[1,128], index: 2, kind: input, shape index: {}]
  %s3 = inlined_call_operand.hbm [shape: f32[128,128], index: 3, kind: output, shape index: {}]
  %s4 = sld [smem:[#allocation0]]
  $region22: #{tpu_custom_call.1} parent=0
    _
  %s6 = ssub.s32 1, %s4
  %s7 = scalar_select 0, %s6, %s4
  $region1: #{tpu_custom_call.1} parent=0
    #allocation2 [shape = 'u8[65536]{0}', space=vmem, size = 0x10000, scoped, tag = 'output window, operand 0, single buffered']
    #allocation3 [shape = 's32[1]{0}', space=sflag, size = 0x4, scoped, tag = 'scoped memory for tpu_custom_call.1']
    %8 = vsyncpa [#allocation3], 0
    // Predicated region
    $region2: #{tpu_custom_call.1} parent=1 // pred_check
      _
    $region3: #{tpu_custom_call.1} parent=1 // pred_check_branch
      %10 = sbr.rel (0) target = $region5
    $region4: #{tpu_custom_call.1} parent=1 // pred_region
      _
    $region5: #{tpu_custom_call.1} parent=1 // pred_fallthru
      _
    // Predicated region
    $region6: #{tpu_custom_call.1} parent=1 // pred_check
      _
    $region7: #{tpu_custom_call.1} parent=1 // pred_check_branch
      %12 = sbr.rel (0) target = $region9
    $region8: #{tpu_custom_call.1} parent=1 // pred_region
      _
    $region9: #{tpu_custom_call.1} parent=1 // pred_fallthru
      _
    // Predicated region
    $region10: #{tpu_custom_call.1} parent=1 // pred_check
      _
    $region11: #{tpu_custom_call.1} parent=1 // pred_check_branch
      %14 = sbr.rel (0) target = $region13
    $region12: #{tpu_custom_call.1} parent=1 // pred_region
      _
    $region13: #{tpu_custom_call.1} parent=1 // pred_fallthru
      _
    %v15 = vld [vmem:[%s0] sm:$0xff]
    %v16 = vld [vmem:[%s0 + $0x8] sm:$0xff]
    %v17 = vld [vmem:[%s0 + $0x10] sm:$0xff]
    %v18 = vld [vmem:[%s0 + $0x18] sm:$0xff]
    %v19 = vld [vmem:[%s0 + $0x20] sm:$0xff]
    %v20 = vld [vmem:[%s0 + $0x28] sm:$0xff]
    %v21 = vld [vmem:[%s0 + $0x30] sm:$0xff]
    %v22 = vld [vmem:[%s0 + $0x38] sm:$0xff]
    %v23 = vld [vmem:[%s0 + $0x40] sm:$0xff]
    %v24 = vld [vmem:[%s0 + $0x48] sm:$0xff]
    %v25 = vld [vmem:[%s0 + $0x50] sm:$0xff]
    %v26 = vld [vmem:[%s0 + $0x58] sm:$0xff]
    %v27 = vld [vmem:[%s0 + $0x60] sm:$0xff]
    %v28 = vld [vmem:[%s0 + $0x68] sm:$0xff]
    %v29 = vld [vmem:[%s0 + $0x70] sm:$0xff]
    %v30 = vld [vmem:[%s0 + $0x78] sm:$0xff]
    %v31 = vld [vmem:[%s1] sm:$0xff]
    %v32 = vld [vmem:[%s1 + $0x8] sm:$0xff]
    %v33 = vld [vmem:[%s1 + $0x10] sm:$0xff]
    %v34 = vld [vmem:[%s1 + $0x18] sm:$0xff]
    %v35 = vld [vmem:[%s1 + $0x20] sm:$0xff]
    %v36 = vld [vmem:[%s1 + $0x28] sm:$0xff]
    %v37 = vld [vmem:[%s1 + $0x30] sm:$0xff]
    %v38 = vld [vmem:[%s1 + $0x38] sm:$0xff]
    %v39 = vld [vmem:[%s1 + $0x40] sm:$0xff]
    %v40 = vld [vmem:[%s1 + $0x48] sm:$0xff]
    %v41 = vld [vmem:[%s1 + $0x50] sm:$0xff]
    %v42 = vld [vmem:[%s1 + $0x58] sm:$0xff]
    %v43 = vld [vmem:[%s1 + $0x60] sm:$0xff]
    %v44 = vld [vmem:[%s1 + $0x68] sm:$0xff]
    %v45 = vld [vmem:[%s1 + $0x70] sm:$0xff]
    %v46 = vld [vmem:[%s1 + $0x78] sm:$0xff]
    %v47 = vld [vmem:[%s2] sm:$0x1]
    %v49 = vperm.slane %v47, 0
    %vm51 = vcmask 261120
    %v53 = vsel %vm51, %v15, 0
    %v56 = vsel %vm51, %v16, 0
    %v59 = vsel %vm51, %v17, 0
    %v62 = vsel %vm51, %v18, 0
    %v65 = vsel %vm51, %v19, 0
    %v68 = vsel %vm51, %v20, 0
    %v71 = vsel %vm51, %v21, 0
    %v74 = vsel %vm51, %v22, 0
    %v77 = vsel %vm51, %v23, 0
    %v80 = vsel %vm51, %v24, 0
    %v83 = vsel %vm51, %v25, 0
    %v86 = vsel %vm51, %v26, 0
    %v89 = vsel %vm51, %v27, 0
    %v92 = vsel %vm51, %v28, 0
    %v95 = vsel %vm51, %v29, 0
    %v98 = vsel %vm51, %v30, 0
    %v101 = vsel %vm51, %v31, 0
    %v104 = vsel %vm51, %v32, 0
    %v107 = vsel %vm51, %v33, 0
    %v110 = vsel %vm51, %v34, 0
    %v113 = vsel %vm51, %v35, 0
    %v116 = vsel %vm51, %v36, 0
    %v119 = vsel %vm51, %v37, 0
    %v122 = vsel %vm51, %v38, 0
    %v125 = vsel %vm51, %v39, 0
    %v128 = vsel %vm51, %v40, 0
    %v131 = vsel %vm51, %v41, 0
    %v134 = vsel %vm51, %v42, 0
    %v137 = vsel %vm51, %v43, 0
    %v140 = vsel %vm51, %v44, 0
    %v143 = vsel %vm51, %v45, 0
    %v146 = vsel %vm51, %v46, 0
    %148 = vmatpush.xpose.msra.mxu0 %v146
    %149 = vmatpush.xpose.msra.mxu0 %v143
    %150 = vmatpush.xpose.msra.mxu0 %v140
    %151 = vmatpush.xpose.msra.mxu0 %v137
    %152 = vmatpush.xpose.msra.mxu0 %v134
    %153 = vmatpush.xpose.msra.mxu0 %v131
    %154 = vmatpush.xpose.msra.mxu0 %v128
    %155 = vmatpush.xpose.msra.mxu0 %v125
    %156 = vmatpush.xpose.msra.mxu0 %v122
    %157 = vmatpush.xpose.msra.mxu0 %v119
    %158 = vmatpush.xpose.msra.mxu0 %v116
    %159 = vmatpush.xpose.msra.mxu0 %v113
    %160 = vmatpush.xpose.msra.mxu0 %v110
    %161 = vmatpush.xpose.msra.mxu0 %v107
    %162 = vmatpush.xpose.msra.mxu0 %v104
    %163 = vmatpush.xpose.msra.mxu0 %v101
    %164 = vmatmul.f32.gmra.mxu0 %v53
    %v165 = vpop.f32.mrf.mxu0
    %v166 = vadd.f32 %v49, %v165
    %167 = vmatmul.f32.gmra.mxu0 %v56
    %v168 = vpop.f32.mrf.mxu0
    %v169 = vadd.f32 %v49, %v168
    %170 = vmatmul.f32.gmra.mxu0 %v59
    %v171 = vpop.f32.mrf.mxu0
    %v172 = vadd.f32 %v49, %v171
    %173 = vmatmul.f32.gmra.mxu0 %v62
    %v174 = vpop.f32.mrf.mxu0
    %v175 = vadd.f32 %v49, %v174
    %176 = vmatmul.f32.gmra.mxu0 %v65
    %v177 = vpop.f32.mrf.mxu0
    %v178 = vadd.f32 %v49, %v177
    %179 = vmatmul.f32.gmra.mxu0 %v68
    %v180 = vpop.f32.mrf.mxu0
    %v181 = vadd.f32 %v49, %v180
    %182 = vmatmul.f32.gmra.mxu0 %v71
    %v183 = vpop.f32.mrf.mxu0
    %v184 = vadd.f32 %v49, %v183
    %185 = vmatmul.f32.gmra.mxu0 %v74
    %v186 = vpop.f32.mrf.mxu0
    %v187 = vadd.f32 %v49, %v186
    %188 = vmatmul.f32.gmra.mxu0 %v77
    %v189 = vpop.f32.mrf.mxu0
    %v190 = vadd.f32 %v49, %v189
    %191 = vmatmul.f32.gmra.mxu0 %v80
    %v192 = vpop.f32.mrf.mxu0
    %v193 = vadd.f32 %v49, %v192
    %194 = vmatmul.f32.gmra.mxu0 %v83
    %v195 = vpop.f32.mrf.mxu0
    %v196 = vadd.f32 %v49, %v195
    %197 = vmatmul.f32.gmra.mxu0 %v86
    %v198 = vpop.f32.mrf.mxu0
    %v199 = vadd.f32 %v49, %v198
    %200 = vmatmul.f32.gmra.mxu0 %v89
    %v201 = vpop.f32.mrf.mxu0
    %v202 = vadd.f32 %v49, %v201
    %203 = vmatmul.f32.gmra.mxu0 %v92
    %v204 = vpop.f32.mrf.mxu0
    %v205 = vadd.f32 %v49, %v204
    %206 = vmatmul.f32.gmra.mxu0 %v95
    %v207 = vpop.f32.mrf.mxu0
    %v208 = vadd.f32 %v49, %v207
    %209 = vmatmul.f32.gmra.mxu0 %v98
    %v210 = vpop.f32.mrf.mxu0
    %v211 = vadd.f32 %v49, %v210
    %212 = vdwg.mxu0
    %213 = vst [vmem:[#allocation2] sm:$0xff] %v166
    %214 = vst [vmem:[#allocation2 + $0x8] sm:$0xff] %v169
    %215 = vst [vmem:[#allocation2 + $0x10] sm:$0xff] %v172
    %216 = vst [vmem:[#allocation2 + $0x18] sm:$0xff] %v175
    %217 = vst [vmem:[#allocation2 + $0x20] sm:$0xff] %v178
    %218 = vst [vmem:[#allocation2 + $0x28] sm:$0xff] %v181
    %219 = vst [vmem:[#allocation2 + $0x30] sm:$0xff] %v184
    %220 = vst [vmem:[#allocation2 + $0x38] sm:$0xff] %v187
    %221 = vst [vmem:[#allocation2 + $0x40] sm:$0xff] %v190
    %222 = vst [vmem:[#allocation2 + $0x48] sm:$0xff] %v193
    %223 = vst [vmem:[#allocation2 + $0x50] sm:$0xff] %v196
    %224 = vst [vmem:[#allocation2 + $0x58] sm:$0xff] %v199
    %225 = vst [vmem:[#allocation2 + $0x60] sm:$0xff] %v202
    %226 = vst [vmem:[#allocation2 + $0x68] sm:$0xff] %v205
    %227 = vst [vmem:[#allocation2 + $0x70] sm:$0xff] %v208
    %228 = vst [vmem:[#allocation2 + $0x78] sm:$0xff] %v211
    // Predicated region
    $region14: #{tpu_custom_call.1} parent=1 // pred_check
      _
    $region15: #{tpu_custom_call.1} parent=1 // pred_check_branch
      %230 = sbr.rel (0) target = $region17
    $region16: #{tpu_custom_call.1} parent=1 // pred_region
      %232 = vsyncadd [#allocation3], 0
      %s233 = sshll.u32 [#allocation2], 4
      %s234 = int_to_ptr.vmem [resolvable:$true] %s233
      %s235 = sshll.u32 %s3, 4
      %s236 = int_to_ptr.hbm [resolvable:$true] %s235
      %241 = dma.vmem_to_hbm [thread:$0]  %s234, 2048, %s236, [#allocation3], 128, 128, 8
    $region17: #{tpu_custom_call.1} parent=1 // pred_fallthru
      _
    // Predicated region
    $region18: #{tpu_custom_call.1} parent=1 // pred_check
      _
    $region19: #{tpu_custom_call.1} parent=1 // pred_check_branch
      %243 = sbr.rel (0) target = $region21
    $region20: #{tpu_custom_call.1} parent=1 // pred_region
      %245 = dma.done [#allocation3], 2048
    $region21: #{tpu_custom_call.1} parent=1 // pred_fallthru
      _
    %246 = vsyncpa [#allocation3], 1

</llo_original>
